<compile_context>
chip_gen: v5e
topology: v5e:2x2
jax: 0.10.0
libtpu: 0.0.40
codegen_flags: <defaults>
</compile_context>

<pallas_src>
import math

import jax
import jax.numpy as jnp
from jax import lax
from jax.experimental import pallas as pl
from jax.experimental.pallas import tpu as pltpu

_LANES = 128


def _bce_with_logits(x, y):
    # BCEWithLogitsLoss(reduction='none'): max(x,0) - x*y + log1p(exp(-|x|))
    return jnp.maximum(x, 0.0) - x * y + jnp.log1p(jnp.exp(-jnp.abs(x)))


def weighted_bce_loss(logits, labels, weights, *, base_tile_rows=4096,
                      num_core_splits=1, core_parallel=False,
                      min_pallas_elems=None):
    """Scalar mean of (elementwise BCE-with-logits * per-class weights)."""
    N, C = logits.shape
    total = N * C
    w_flat = weights.reshape(-1).astype(jnp.float32)

    # Weight pattern repeats every lcm(C, 128) flattened elements.
    # row_quantum = lcm(8, C / gcd(C, 128)) rows: sublane aligned, and every
    # (row_quantum, 128) window at a row offset that is a multiple of
    # row_quantum carries the identical per-class weight pattern.
    period = C // math.gcd(C, _LANES)
    row_quantum = (8 * period) // math.gcd(8, period)
    tile_rows = pl.cdiv(base_tile_rows, row_quantum) * row_quantum
    tile_elems = tile_rows * _LANES
    k_fold = tile_rows // row_quantum

    if min_pallas_elems is None:
        min_pallas_elems = tile_elems
    if total < max(tile_elems, min_pallas_elems):
        # Small-input fallback: fused XLA beats pallas_call fixed costs below
        # ~1 tile of work (also keeps every kernel block fully inside the array).
        x = logits.astype(jnp.float32)
        y = labels.astype(jnp.float32)
        return jnp.mean(_bce_with_logits(x, y) * w_flat)

    # Lane-dense layout: flatten (free for contiguous data) and view as
    # (rows, 128).  Pad only to the next 128 boundary, and only if needed;
    # out-of-range elements are masked in-kernel so the pad value is irrelevant.
    x = logits.reshape(-1)
    y = labels.reshape(-1)
    rem = total % _LANES
    if rem:
        # TODO(synk): a fully pad-free path for N*C % 128 != 0 needs 1-D blocks
        # or manual DMA from a flat HBM ref; the copy is only paid in that case.
        x = jnp.pad(x, (0, _LANES - rem))
        y = jnp.pad(y, (0, _LANES - rem))
    rows = x.shape[0] // _LANES
    x2 = x.reshape(rows, _LANES)
    y2 = y.reshape(rows, _LANES)

    # Minimal repeating weight block (56x128 = 28 KiB for C=7); the full
    # per-element weight pattern is never materialized or streamed.
    w_block = jnp.tile(w_flat, (row_quantum * _LANES) // C).reshape(
        row_quantum, _LANES)

    splits = max(1, int(num_core_splits))
    n_tiles = pl.cdiv(rows, tile_rows)
    tiles_per_core = pl.cdiv(n_tiles, splits)
    n_tiles_g = tiles_per_core * splits
    needs_mask = (n_tiles_g * tile_elems != total)

    def kernel(x_ref, y_ref, w_ref, out_ref, acc_ref):
        i = pl.program_id(0)
        j = pl.program_id(1)

        @pl.when(j == 0)
        def _():
            acc_ref[...] = jnp.zeros_like(acc_ref)

        xv = x_ref[...].astype(jnp.float32)
        yv = y_ref[...].astype(jnp.float32)
        loss = _bce_with_logits(xv, yv)

        if needs_mask:
            # Select (not a 0/1 multiply): out-of-bounds rows of a ragged or
            # clamped block hold undefined data (possibly NaN/Inf).
            t = i * tiles_per_core + j
            row_i = lax.broadcasted_iota(jnp.int32, (tile_rows, _LANES), 0)
            lane_i = lax.broadcasted_iota(jnp.int32, (tile_rows, _LANES), 1)
            gidx = (t * tile_rows + row_i) * _LANES + lane_i
            loss = jnp.where(gidx < total, loss, 0.0)

        # Hot loop: pure elementwise accumulate (no weight stream).
        acc_ref[...] += loss

        @pl.when(j == pl.num_programs(1) - 1)
        def _():
            # Fold the (tile_rows, 128) accumulator onto one (row_quantum, 128)
            # weight period using static ref slices, then a single weighted
            # cross-lane reduce per core.
            folded = acc_ref[0:row_quantum, :]
            for q in range(1, k_fold):
                folded = folded + acc_ref[q * row_quantum:(q + 1) * row_quantum, :]
            out_ref[0, 0] = jnp.sum(folded * w_ref[...])

    last_blk = n_tiles - 1
    if n_tiles_g > n_tiles:
        # Blocks past the array (round-up for the core split) re-read the last
        # valid block; their contribution is masked to zero in the kernel.
        xy_map = lambda i, j: (jnp.minimum(i * tiles_per_core + j, last_blk), 0)
    else:
        xy_map = lambda i, j: (i * tiles_per_core + j, 0)

    if core_parallel and splits > 1:
        # v7x: actually shard the leading grid axis across the 2 TensorCores.
        dims = (pltpu.CORE_PARALLEL, pltpu.ARBITRARY)
    else:
        dims = ("arbitrary", "arbitrary")

    partials = pl.pallas_call(
        kernel,
        out_shape=jax.ShapeDtypeStruct((splits, 1), jnp.float32),
        grid_spec=pltpu.PrefetchScalarGridSpec(
            num_scalar_prefetch=0,
            grid=(splits, tiles_per_core),
            in_specs=[
                pl.BlockSpec((tile_rows, _LANES), xy_map),
                pl.BlockSpec((tile_rows, _LANES), xy_map),
                pl.BlockSpec((row_quantum, _LANES), lambda i, j: (0, 0)),
            ],
            out_specs=pl.BlockSpec((1, 1), lambda i, j: (i, 0),
                                   memory_space=pltpu.SMEM),
            scratch_shapes=[pltpu.VMEM((tile_rows, _LANES), jnp.float32)],
        ),
        compiler_params=pltpu.CompilerParams(
            dimension_semantics=dims,
            vmem_limit_bytes=32 * 1024 * 1024,
        ),
    )(x2, y2, w_block)
    return jnp.sum(partials) / jnp.float32(total)


def _reference(logits, labels, weights):
    x = logits.astype(jnp.float32)
    y = labels.astype(jnp.float32)
    loss = jnp.maximum(x, 0.0) - x * y + jnp.log1p(jnp.exp(-jnp.abs(x)))
    return jnp.mean(loss * weights.reshape(1, -1).astype(jnp.float32))


if __name__ == "__main__":
    num_classes = 7  # labels['java'] has 7 categories
    weights = jnp.asarray([0.5, 1.0, 1.5, 2.0, 0.75, 1.25, 0.9], jnp.float32)
    key = jax.random.PRNGKey(0)

    def make(batch, k, label_dtype=jnp.float32):
        k1, k2 = jax.random.split(k)
        lg = jax.random.normal(k1, (batch, num_classes), dtype=jnp.float32)
        lb = (jax.random.uniform(k2, (batch, num_classes)) > 0.5).astype(label_dtype)
        return lg, lb

    cases = [
        # (batch, kwargs, label_dtype, rtol)
        (16,    dict(),                                        jnp.float32,  1e-5),  # small-input fallback
        (2048,  dict(base_tile_rows=8),                        jnp.float32,  1e-5),  # multi-tile, fully aligned
        (1031,  dict(base_tile_rows=8),                        jnp.float32,  1e-5),  # ragged tail + pad + mask
        (3072,  dict(base_tile_rows=8, num_core_splits=2),     jnp.float32,  1e-5),  # core split + clamped block
        (2048,  dict(base_tile_rows=8),                        jnp.bfloat16, 1e-5),  # narrow (bf16) labels
        (76800, dict(),                                        jnp.float32,  1e-4),  # default big tiles
    ]

    keys = jax.random.split(key, len(cases))
    for (batch, kwargs, ldt, rtol), k in zip(cases, keys):
        lg, lb = make(batch, k, ldt)
        out = jax.block_until_ready(weighted_bce_loss(lg, lb, weights, **kwargs))
        ref = _reference(lg, lb, weights)
        assert jnp.allclose(out, ref, rtol=rtol, atol=1e-6), (batch, kwargs, out, ref)

    print("KERNEL_OK")
</pallas_src>

<mosaic_0001>
module attributes {stable_mosaic.version = 11 : i64} {
  func.func @kernel(%arg0: i32, %arg1: i32, %arg2: memref<56x128xf32, #tpu.memory_space<vmem>>, %arg3: memref<56x128xf32, #tpu.memory_space<vmem>>, %arg4: memref<56x128xf32, #tpu.memory_space<vmem>>, %arg5: memref<1x1xf32, #tpu.memory_space<smem>>, %arg6: memref<56x128xf32, #tpu.memory_space<vmem>>) attributes {dimension_semantics = [#tpu.dimension_semantics<arbitrary>, #tpu.dimension_semantics<arbitrary>], iteration_bounds = array<i64: 1, 2>, scalar_prefetch = 0 : i64, scratch_operands = 1 : i64, tpu.core_type = #tpu.core_type<tc>, window_params = [{transform_indices = @transform_0, window_bounds = array<i64: 56, 128>}, {transform_indices = @transform_1, window_bounds = array<i64: 56, 128>}, {pipeline_mode = #tpu.pipeline_mode<synchronous>, transform_indices = @transform_2, window_bounds = array<i64: 56, 128>}, {transform_indices = @transform_3, window_bounds = array<i64: 1, 1>}]} {
    %c0_i32 = arith.constant 0 : i32
    %0 = arith.cmpi eq, %arg1, %c0_i32 : i32
    %1 = arith.extui %0 : i1 to i32
    %c0_i32_0 = arith.constant 0 : i32
    %2 = arith.cmpi ne, %1, %c0_i32_0 : i32
    scf.if %2 {
      %cst_10 = arith.constant 0.000000e+00 : f32
      %21 = vector.broadcast %cst_10 : f32 to vector<56x128xf32>
      %c0_11 = arith.constant 0 : index
      %c0_12 = arith.constant 0 : index
      %22 = vector.load %arg6[%c0_11, %c0_12] : memref<56x128xf32, #tpu.memory_space<vmem>>, vector<56x128xf32>
      tpu.vector_store %arg6[%c0_11, %c0_12], %21 {strides = array<i32>} : memref<56x128xf32, #tpu.memory_space<vmem>>, vector<56x128xf32>,
    } else {
    }
    %c0 = arith.constant 0 : index
    %c0_1 = arith.constant 0 : index
    %3 = vector.load %arg2[%c0, %c0_1] : memref<56x128xf32, #tpu.memory_space<vmem>>, vector<56x128xf32>
    %c0_2 = arith.constant 0 : index
    %c0_3 = arith.constant 0 : index
    %4 = vector.load %arg3[%c0_2, %c0_3] : memref<56x128xf32, #tpu.memory_space<vmem>>, vector<56x128xf32>
    %cst = arith.constant 0.000000e+00 : f32
    %5 = vector.broadcast %cst : f32 to vector<56x128xf32>
    %6 = arith.maximumf %3, %5 : vector<56x128xf32>
    %7 = arith.mulf %3, %4 : vector<56x128xf32>
    %8 = arith.subf %6, %7 : vector<56x128xf32>
    %9 = math.absf %3 : vector<56x128xf32>
    %cst_4 = arith.constant 0.000000e+00 : f32
    %10 = vector.broadcast %cst_4 : f32 to vector<56x128xf32>
    %11 = arith.subf %10, %9 : vector<56x128xf32>
    %12 = math.exp %11 : vector<56x128xf32>
    %13 = math.log1p %12 : vector<56x128xf32>
    %14 = arith.addf %8, %13 : vector<56x128xf32>
    %c0_5 = arith.constant 0 : index
    %c0_6 = arith.constant 0 : index
    %15 = vector.load %arg6[%c0_5, %c0_6] : memref<56x128xf32, #tpu.memory_space<vmem>>, vector<56x128xf32>
    %16 = arith.addf %15, %14 : vector<56x128xf32>
    %c0_7 = arith.constant 0 : index
    %c0_8 = arith.constant 0 : index
    %17 = vector.load %arg6[%c0_7, %c0_8] : memref<56x128xf32, #tpu.memory_space<vmem>>, vector<56x128xf32>
    tpu.vector_store %arg6[%c0_7, %c0_8], %16 {strides = array<i32>} : memref<56x128xf32, #tpu.memory_space<vmem>>, vector<56x128xf32>,
    %c1_i32 = arith.constant 1 : i32
    %18 = arith.cmpi eq, %arg1, %c1_i32 : i32
    %19 = arith.extui %18 : i1 to i32
    %c0_i32_9 = arith.constant 0 : i32
    %20 = arith.cmpi ne, %19, %c0_i32_9 : i32
    scf.if %20 {
      %c0_10 = arith.constant 0 : index
      %c0_11 = arith.constant 0 : index
      %21 = vector.load %arg6[%c0_10, %c0_11] : memref<56x128xf32, #tpu.memory_space<vmem>>, vector<56x128xf32>
      %c0_12 = arith.constant 0 : index
      %c0_13 = arith.constant 0 : index
      %22 = vector.load %arg4[%c0_12, %c0_13] : memref<56x128xf32, #tpu.memory_space<vmem>>, vector<56x128xf32>
      %23 = arith.mulf %21, %22 : vector<56x128xf32>
      %24 = vector.shape_cast %23 : vector<56x128xf32> to vector<1x56x128xf32>
      %cst_14 = arith.constant dense<0.000000e+00> : vector<1xf32>
      %25 = vector.multi_reduction <add>, %24, %cst_14 [1, 2] : vector<1x56x128xf32> to vector<1xf32>
      %26 = vector.shape_cast %25 : vector<1xf32> to vector<1x1x1xf32>
      %27 = vector.extract %26[0, 0, 0] : f32 from vector<1x1x1xf32>
      %c0_15 = arith.constant 0 : index
      %c0_16 = arith.constant 0 : index
      %28 = memref.load %arg5[%c0_15, %c0_16] : memref<1x1xf32, #tpu.memory_space<smem>>
      memref.store %27, %arg5[%c0_15, %c0_16] : memref<1x1xf32, #tpu.memory_space<smem>>
    } else {
    }
    return
  }
  func.func @transform_0(%arg0: i32, %arg1: i32) -> (i32, i32) {
    %c2_i32 = arith.constant 2 : i32
    %0 = arith.muli %arg0, %c2_i32 : i32
    %1 = arith.addi %0, %arg1 : i32
    %c0_i32 = arith.constant 0 : i32
    %c0_i32_0 = arith.constant 0 : i32
    return %1, %c0_i32 : i32, i32
  }
  func.func @transform_1(%arg0: i32, %arg1: i32) -> (i32, i32) {
    %c2_i32 = arith.constant 2 : i32
    %0 = arith.muli %arg0, %c2_i32 : i32
    %1 = arith.addi %0, %arg1 : i32
    %c0_i32 = arith.constant 0 : i32
    %c0_i32_0 = arith.constant 0 : i32
    return %1, %c0_i32 : i32, i32
  }
  func.func @transform_2(%arg0: i32, %arg1: i32) -> (i32, i32) {
    %c0_i32 = arith.constant 0 : i32
    %c0_i32_0 = arith.constant 0 : i32
    %c0_i32_1 = arith.constant 0 : i32
    return %c0_i32, %c0_i32_0 : i32, i32
  }
  func.func @transform_3(%arg0: i32, %arg1: i32) -> (i32, i32) {
    %c0_i32 = arith.constant 0 : i32
    %c0_i32_0 = arith.constant 0 : i32
    return %arg0, %c0_i32 : i32, i32
  }
}

</mosaic_0001>

<llo_original>
// kernel: tpu_custom_call.1
$region0: #{tpu_custom_call.1}
  #allocation0 [shape = 'u32[]', space=smem, size = 0x4, offset = 0x4, fixed_abs, tag = 'smem constant byte address 0x4 - core index']
  #allocation1 [shape = 'u32[72,128]{1,0:T(1,128)}', space=vmem, size = 0x9000, scoped, tag = 'internal scratch']
  #allocation2 [shape = 'f32[56,128]{1,0:T(8,128)}', space=vmem, size = 0x7000, scoped, tag = 'scratch operand']
  %s0 = inlined_call_operand.hbm [shape: f32[112,128], index: 0, kind: input, shape index: {}]
  %s1 = inlined_call_operand.hbm [shape: f32[112,128], index: 1, kind: input, shape index: {}]
  %s2 = inlined_call_operand.hbm [shape: f32[56,128], index: 2, kind: input, shape index: {}]
  %s3 = inlined_call_operand.hbm [shape: f32[1,1], index: 3, kind: output, shape index: {}]
  %s4 = sld [smem:[#allocation0]]
  $region65: #{tpu_custom_call.1} parent=0
    _
  %s6 = ssub.s32 1, %s4
  %s7 = scalar_select 0, %s6, %s4
  $region1: #{tpu_custom_call.1} parent=0
    #allocation3 [shape = 'u8[57344]{0}', space=vmem, size = 0xe000, scoped, tag = 'input window, operand 0']
    #allocation4 [shape = 's32[2]{0}', space=sflag, size = 0x8, scoped, tag = 'scoped memory for tpu_custom_call.1']
    #allocation5 [shape = 's32[2]{0}', space=sflag, size = 0x8, scoped, tag = 'scoped memory for tpu_custom_call.1']
    #allocation6 [shape = 'u8[57344]{0}', space=vmem, size = 0xe000, scoped, tag = 'input window, operand 1']
    #allocation7 [shape = 's32[2]{0}', space=sflag, size = 0x8, scoped, tag = 'scoped memory for tpu_custom_call.1']
    #allocation8 [shape = 'u8[28672]{0}', space=vmem, size = 0x7000, scoped, tag = 'input window, operand 2, single buffered']
    #allocation9 [shape = 'u8[512]{0}', space=smem, size = 0x200, scoped, tag = 'output window, operand 0, single buffered']
    %8 = vsyncpa [#allocation4], 0
    %s9 = scalar_lea.sflag [#allocation4], 1
    %10 = vsyncpa %s9, 0
    %11 = vsyncpa [#allocation7], 0
    %s12 = scalar_lea.sflag [#allocation7], 1
    %13 = vsyncpa %s12, 0
    %14 = vsyncpa [#allocation5], 0
    loop: start=0, step=1, limit=4
    $region2: #{tpu_custom_call.1} parent=1 // loop_pre_header
      _
    $region3: #{tpu_custom_call.1} parent=1 // loop_header
      %s16 = sphi 0, %s20
      %p17 = scmp.ge.s32.totalorder %s16, 4
      %s23 = sphi 0, %s35
      %s24 = sphi 0, %s31
      %s25 = sphi 0, %s23
      %s26 = sphi 0, %s24
      %s27 = sphi 0, %s25
      %s28 = sphi 0, %s26
      %s42 = sphi 0, %s44
      %s45 = sphi 0, %s42
      %s46 = sphi 0, %s45
      %s62 = sphi 0, %s46
      %s72 = sphi 0, %s74
      %s75 = sphi 0, %s72
      %s76 = sphi 0, %s75
      %s92 = sphi 0, %s76
      %s96 = sphi 0, %s96
      %s98 = sphi 0, %s96
      %s99 = sphi 0, %s98
      %s113 = sphi 0, %s99
      %s119 = sphi 0, %s121
      %s122 = sphi 0, %s119
      %s123 = sphi 0, %s122
      %s139 = sphi 0, %s123
    $region4: #{tpu_custom_call.1} parent=1 // loop_header_branch
      %19 = sbr.rel (%p17) target = $region8
    $region5: #{tpu_custom_call.1} parent=1 // loop_body
      %s21 = ssub.s32 %s16, 1
      %s22 = ssub.s32 %s16, 2
      %s29 = sadd.s32 1, %s24
      %p30 = scmp.ge.s32.totalorder %s29, 2
      %s31 = scalar_select %p30, 0, %s29
      %s32 = sadd.s32 1, %s23
      %s33 = scalar_select %p30, %s32, %s23
      %p34 = scmp.ge.s32.totalorder %s33, 1
      %s35 = scalar_select %p34, 0, %s33
      %s36 = smul.u32 %s23, 2
      %s37 = sadd.s32 %s36, %s24
      %s38 = smul.u32 %s35, 2
      %s39 = sadd.s32 %s38, %s31
      %s40 = ssub.s32 %s37, %s39
      %p41 = scmp.eq.s32.totalorder %s40, 0
      %s43 = sadd.s32 %s42, 1
      %s44 = scalar_select %p41, %s42, %s43
      %p47 = pneg %p41
      %p48 = scmp.eq.s32.totalorder %s16, 1
      %p49 = por %p47, %p48
      %p50 = scmp.ne.s32.totalorder %s42, %s45
      %p51 = scmp.eq.s32.totalorder %s16, 0
      %p52 = por %p50, %p51
      %p53 = scmp.ne.s32.totalorder %s42, %s45
      %p54 = scmp.eq.s32.totalorder %s21, 1
      %p55 = por %p53, %p54
      %p56 = scmp.ne.s32.totalorder %s45, %s46
      %p57 = scmp.eq.s32.totalorder %s21, 0
      %p58 = por %p56, %p57
      %p59 = scmp.ne.s32.totalorder %s45, %s46
      %p60 = scmp.eq.s32.totalorder %s22, 1
      %p61 = por %p59, %p60
      %p63 = scmp.ne.s32.totalorder %s46, %s62
      %p64 = scmp.eq.s32.totalorder %s22, 0
      %p65 = por %p63, %p64
      %s66 = smul.u32 %s23, 2
      %s67 = sadd.s32 %s66, %s24
      %s68 = smul.u32 %s35, 2
      %s69 = sadd.s32 %s68, %s31
      %s70 = ssub.s32 %s67, %s69
      %p71 = scmp.eq.s32.totalorder %s70, 0
      %s73 = sadd.s32 %s72, 1
      %s74 = scalar_select %p71, %s72, %s73
      %p77 = pneg %p71
      %p78 = scmp.eq.s32.totalorder %s16, 1
      %p79 = por %p77, %p78
      %p80 = scmp.ne.s32.totalorder %s72, %s75
      %p81 = scmp.eq.s32.totalorder %s16, 0
      %p82 = por %p80, %p81
      %p83 = scmp.ne.s32.totalorder %s72, %s75
      %p84 = scmp.eq.s32.totalorder %s21, 1
      %p85 = por %p83, %p84
      %p86 = scmp.ne.s32.totalorder %s75, %s76
      %p87 = scmp.eq.s32.totalorder %s21, 0
      %p88 = por %p86, %p87
      %p89 = scmp.ne.s32.totalorder %s75, %s76
      %p90 = scmp.eq.s32.totalorder %s22, 1
      %p91 = por %p89, %p90
      %p93 = scmp.ne.s32.totalorder %s76, %s92
      %p94 = scmp.eq.s32.totalorder %s22, 0
      %p95 = por %p93, %p94
      %s97 = sadd.s32 %s96, 1
      %p100 = scmp.eq.s32.totalorder %s16, 1
      %p101 = scmp.ne.s32.totalorder %s96, %s98
      %p102 = scmp.eq.s32.totalorder %s16, 0
      %p103 = por %p101, %p102
      %p104 = scmp.ne.s32.totalorder %s96, %s98
      %p105 = scmp.eq.s32.totalorder %s21, 1
      %p106 = por %p104, %p105
      %p107 = scmp.ne.s32.totalorder %s98, %s99
      %p108 = scmp.eq.s32.totalorder %s21, 0
      %p109 = por %p107, %p108
      %p110 = scmp.ne.s32.totalorder %s98, %s99
      %p111 = scmp.eq.s32.totalorder %s22, 1
      %p112 = por %p110, %p111
      %p114 = scmp.ne.s32.totalorder %s99, %s113
      %p115 = scmp.eq.s32.totalorder %s22, 0
      %p116 = por %p114, %p115
      %s117 = ssub.s32 %s23, %s35
      %p118 = scmp.eq.s32.totalorder %s117, 0
      %s120 = sadd.s32 %s119, 1
      %s121 = scalar_select %p118, %s119, %s120
      %p124 = pneg %p118
      %p125 = scmp.eq.s32.totalorder %s16, 1
      %p126 = por %p124, %p125
      %p127 = scmp.ne.s32.totalorder %s119, %s122
      %p128 = scmp.eq.s32.totalorder %s16, 0
      %p129 = por %p127, %p128
      %p130 = scmp.ne.s32.totalorder %s119, %s122
      %p131 = scmp.eq.s32.totalorder %s21, 1
      %p132 = por %p130, %p131
      %p133 = scmp.ne.s32.totalorder %s122, %s123
      %p134 = scmp.eq.s32.totalorder %s21, 0
      %p135 = por %p133, %p134
      %p136 = scmp.ne.s32.totalorder %s122, %s123
      %p137 = scmp.eq.s32.totalorder %s22, 1
      %p138 = por %p136, %p137
      %p140 = scmp.ne.s32.totalorder %s123, %s139
      %p141 = scmp.eq.s32.totalorder %s22, 0
      %p142 = por %p140, %p141
      %p143 = scmp.le.s32.totalorder 1, %s16
      %p144 = scmp.lt.s32.totalorder %s16, 3
      %p145 = pnand %p143, %p144
      %p146 = pneg %p145
      // Predicated region
      $region9: #{tpu_custom_call.1} parent=5 // pred_check
        _
      $region10: #{tpu_custom_call.1} parent=5 // pred_check_branch
        %148 = sbr.rel (%p145) target = $region12
      $region11: #{tpu_custom_call.1} parent=5 // pred_region
        %s149 = ssub.s32 %s16, 1
        // Predicated region
        $region13: #{tpu_custom_call.1} parent=11 // pred_check
          %p150 = pneg %p109
        $region14: #{tpu_custom_call.1} parent=11 // pred_check_branch
          %152 = sbr.rel (%p150) target = $region16
        $region15: #{tpu_custom_call.1} parent=11 // pred_region
          %154 = vsyncadd [#allocation7], 0
          %s155 = sshll.u32 %s2, 4
          %s156 = int_to_ptr.hbm [resolvable:$true] %s155
          %s157 = sshll.u32 [#allocation8], 4
          %s158 = int_to_ptr.vmem [resolvable:$true] %s157
          %163 = dma.hbm_to_vmem [thread:$0]  %s156, 896, %s158, [#allocation7], 128, 128, 8
        $region16: #{tpu_custom_call.1} parent=11 // pred_fallthru
          _
      $region12: #{tpu_custom_call.1} parent=5 // pred_fallthru
        _
      %p164 = scmp.lt.s32.totalorder %s16, 2
      // Predicated region
      $region17: #{tpu_custom_call.1} parent=5 // pred_check
        %p165 = pneg %p164
      $region18: #{tpu_custom_call.1} parent=5 // pred_check_branch
        %167 = sbr.rel (%p165) target = $region20
      $region19: #{tpu_custom_call.1} parent=5 // pred_region
        // Predicated region
        $region21: #{tpu_custom_call.1} parent=19 // pred_check
          %p168 = pneg %p52
        $region22: #{tpu_custom_call.1} parent=19 // pred_check_branch
          %170 = sbr.rel (%p168) target = $region24
        $region23: #{tpu_custom_call.1} parent=19 // pred_region
          %s171 = sand.u32 %s42, 1
          %s172 = scalar_lea.sflag [#allocation4], %s171
          %s173 = sand.u32 %s42, 1
          %s174 = smul.addr %s173, 56
          %s175 = scalar_lea.vmem [#allocation3], %s174
          %s176 = smul.u32 %s23, 2
          %s177 = sadd.s32 %s176, %s24
          %s178 = smul.u32 7, %s177
          %180 = vsyncadd %s172, 0
          %s181 = smul.addr %s178, 8
          %s182 = scalar_lea.hbm %s0, %s181
          %s183 = sshll.u32 %s182, 4
          %s184 = int_to_ptr.hbm [resolvable:$true] %s183
          %s185 = sshll.u32 %s175, 4
          %s186 = int_to_ptr.vmem [resolvable:$true] %s185
          %191 = dma.hbm_to_vmem [thread:$0]  %s184, 896, %s186, %s172, 128, 128, 8
        $region24: #{tpu_custom_call.1} parent=19 // pred_fallthru
          _
        // Predicated region
        $region25: #{tpu_custom_call.1} parent=19 // pred_check
          %p192 = pneg %p82
        $region26: #{tpu_custom_call.1} parent=19 // pred_check_branch
          %194 = sbr.rel (%p192) target = $region28
        $region27: #{tpu_custom_call.1} parent=19 // pred_region
          %s195 = sand.u32 %s16, 1
          %s196 = scalar_lea.sflag [#allocation7], %s195
          %s197 = sand.u32 %s72, 1
          %s198 = smul.addr %s197, 56
          %s199 = scalar_lea.vmem [#allocation6], %s198
          %s200 = smul.u32 %s23, 2
          %s201 = sadd.s32 %s200, %s24
          %s202 = smul.u32 7, %s201
          %204 = vsyncadd %s196, 0
          %s205 = smul.addr %s202, 8
          %s206 = scalar_lea.hbm %s1, %s205
          %s207 = sshll.u32 %s206, 4
          %s208 = int_to_ptr.hbm [resolvable:$true] %s207
          %s209 = sshll.u32 %s199, 4
          %s210 = int_to_ptr.vmem [resolvable:$true] %s209
          %215 = dma.hbm_to_vmem [thread:$0]  %s208, 896, %s210, %s196, 128, 128, 8
        $region28: #{tpu_custom_call.1} parent=19 // pred_fallthru
          _
      $region20: #{tpu_custom_call.1} parent=5 // pred_fallthru
        _
      %p216 = scmp.le.s32.totalorder 1, %s16
      %p217 = scmp.lt.s32.totalorder %s16, 3
      %p218 = pnand %p216, %p217
      %p219 = pneg %p218
      // Predicated region
      $region29: #{tpu_custom_call.1} parent=5 // pred_check
        _
      $region30: #{tpu_custom_call.1} parent=5 // pred_check_branch
        %221 = sbr.rel (%p218) target = $region32
      $region31: #{tpu_custom_call.1} parent=5 // pred_region
        %s222 = ssub.s32 %s16, 1
        %s223 = sand.u32 %s45, 1
        %s224 = scalar_lea.sflag [#allocation4], %s223
        %s225 = sand.u32 %s45, 1
        %s226 = smul.addr %s225, 56
        %s227 = scalar_lea.vmem [#allocation3], %s226
        // Predicated region
        $region33: #{tpu_custom_call.1} parent=31 // pred_check
          %p228 = pneg %p58
        $region34: #{tpu_custom_call.1} parent=31 // pred_check_branch
          %230 = sbr.rel (%p228) target = $region36
        $region35: #{tpu_custom_call.1} parent=31 // pred_region
          %232 = dma.done %s224, 896
        $region36: #{tpu_custom_call.1} parent=31 // pred_fallthru
          _
        %s233 = sand.u32 %s21, 1
        %s234 = scalar_lea.sflag [#allocation7], %s233
        %s235 = sand.u32 %s75, 1
        %s236 = smul.addr %s235, 56
        %s237 = scalar_lea.vmem [#allocation6], %s236
        // Predicated region
        $region37: #{tpu_custom_call.1} parent=31 // pred_check
          %p238 = pneg %p88
        $region38: #{tpu_custom_call.1} parent=31 // pred_check_branch
          %240 = sbr.rel (%p238) target = $region40
        $region39: #{tpu_custom_call.1} parent=31 // pred_region
          %242 = dma.done %s234, 896
        $region40: #{tpu_custom_call.1} parent=31 // pred_fallthru
          _
        // Predicated region
        $region41: #{tpu_custom_call.1} parent=31 // pred_check
          %p243 = pneg %p109
        $region42: #{tpu_custom_call.1} parent=31 // pred_check_branch
          %245 = sbr.rel (%p243) target = $region44
        $region43: #{tpu_custom_call.1} parent=31 // pred_region
          %247 = dma.done [#allocation7], 896
        $region44: #{tpu_custom_call.1} parent=31 // pred_fallthru
          _
        %s248 = sand.u32 %s45, 1
        %s249 = scalar_lea.sflag [#allocation4], %s248
        %s250 = sand.u32 %s45, 1
        %s251 = smul.addr %s250, 56
        %s252 = scalar_lea.vmem [#allocation3], %s251
        %p253 = pneg %p58
        %p254 = pneg %p55
        %s255 = sand.u32 %s21, 1
        %s256 = scalar_lea.sflag [#allocation7], %s255
        %s257 = sand.u32 %s75, 1
        %s258 = smul.addr %s257, 56
        %s259 = scalar_lea.vmem [#allocation6], %s258
        %p260 = pneg %p88
        %p261 = pneg %p85
        %p262 = pneg %p109
        %p263 = pneg %p106
        %p264 = pneg %p135
        %p265 = pneg %p132
        %s266 = smul.u32 %s25, 2
        %s267 = sadd.s32 %s266, %s26
        %s268 = smul.u32 7, %s267
        %s269 = smul.u32 %s25, 2
        %s270 = sadd.s32 %s269, %s26
        %s271 = smul.u32 7, %s270
        %p272 = scmp.eq.s32.totalorder %s26, 0
        // Predicated region
        $region45: #{tpu_custom_call.1} parent=31 // pred_check
          %p273 = pneg %p272
        $region46: #{tpu_custom_call.1} parent=31 // pred_check_branch
          %275 = sbr.rel (%p273) target = $region48
        $region47: #{tpu_custom_call.1} parent=31 // pred_region
          %276 = vst [vmem:[#allocation2] sm:$0xff] 0.0
          %277 = vst [vmem:[#allocation2 + $0x8] sm:$0xff] 0.0
          %278 = vst [vmem:[#allocation2 + $0x10] sm:$0xff] 0.0
          %279 = vst [vmem:[#allocation2 + $0x18] sm:$0xff] 0.0
          %280 = vst [vmem:[#allocation2 + $0x20] sm:$0xff] 0.0
          %281 = vst [vmem:[#allocation2 + $0x28] sm:$0xff] 0.0
          %282 = vst [vmem:[#allocation2 + $0x30] sm:$0xff] 0.0
        $region48: #{tpu_custom_call.1} parent=31 // pred_fallthru
          _
        %v283 = vld [vmem:[%s227] sm:$0xff]
        %v284 = vld [vmem:[%s227 + $0x8] sm:$0xff]
        %v285 = vld [vmem:[%s227 + $0x10] sm:$0xff]
        %v286 = vld [vmem:[%s227 + $0x18] sm:$0xff]
        %v287 = vld [vmem:[%s227 + $0x20] sm:$0xff]
        %v288 = vld [vmem:[%s227 + $0x28] sm:$0xff]
        %v289 = vld [vmem:[%s227 + $0x30] sm:$0xff]
        %v290 = vld [vmem:[%s237] sm:$0xff]
        %v291 = vld [vmem:[%s237 + $0x8] sm:$0xff]
        %v292 = vld [vmem:[%s237 + $0x10] sm:$0xff]
        %v293 = vld [vmem:[%s237 + $0x18] sm:$0xff]
        %v294 = vld [vmem:[%s237 + $0x20] sm:$0xff]
        %v295 = vld [vmem:[%s237 + $0x28] sm:$0xff]
        %v296 = vld [vmem:[%s237 + $0x30] sm:$0xff]
        %v297 = vmax.f32 %v283, 0.0
        %v298 = vmax.f32 %v284, 0.0
        %v299 = vmax.f32 %v285, 0.0
        %v300 = vmax.f32 %v286, 0.0
        %v301 = vmax.f32 %v287, 0.0
        %v302 = vmax.f32 %v288, 0.0
        %v303 = vmax.f32 %v289, 0.0
        %v304 = vmul.f32 %v283, %v290
        %v305 = vmul.f32 %v284, %v291
        %v306 = vmul.f32 %v285, %v292
        %v307 = vmul.f32 %v286, %v293
        %v308 = vmul.f32 %v287, %v294
        %v309 = vmul.f32 %v288, %v295
        %v310 = vmul.f32 %v289, %v296
        %v311 = vsub.f32 %v297, %v304
        %v312 = vsub.f32 %v298, %v305
        %v313 = vsub.f32 %v299, %v306
        %v314 = vsub.f32 %v300, %v307
        %v315 = vsub.f32 %v301, %v308
        %v316 = vsub.f32 %v302, %v309
        %v317 = vsub.f32 %v303, %v310
        %v318 = vand.u32 2147483647, %v283
        %v319 = vand.u32 2147483647, %v284
        %v320 = vand.u32 2147483647, %v285
        %v321 = vand.u32 2147483647, %v286
        %v322 = vand.u32 2147483647, %v287
        %v323 = vand.u32 2147483647, %v288
        %v324 = vand.u32 2147483647, %v289
        %v325 = vsub.f32 0.0, %v318
        %v326 = vsub.f32 0.0, %v319
        %v327 = vsub.f32 0.0, %v320
        %v328 = vsub.f32 0.0, %v321
        %v329 = vsub.f32 0.0, %v322
        %v330 = vsub.f32 0.0, %v323
        %v331 = vsub.f32 0.0, %v324
        %v332 = vmul.f32 %v325, 1.442695
        %v333 = vpow.pop %v332
        %v334 = vmul.f32 %v326, 1.442695
        %v335 = vpow.pop %v334
        %v336 = vmul.f32 %v327, 1.442695
        %v337 = vpow.pop %v336
        %v338 = vmul.f32 %v328, 1.442695
        %v339 = vpow.pop %v338
        %v340 = vmul.f32 %v329, 1.442695
        %v341 = vpow.pop %v340
        %v342 = vmul.f32 %v330, 1.442695
        %v343 = vpow.pop %v342
        %v344 = vmul.f32 %v331, 1.442695
        %v345 = vpow.pop %v344
        %v346 = vadd.f32 %v333, 1.0
        %v347 = vlog2.pop %v346
        %v348 = vmul.f32 %v347, 0.6931472
        %v349 = vmul.f32 -0.5, %v333
        %v350 = vadd.f32 %v349, 1.0
        %v351 = vmul.f32 %v350, %v333
        %v352 = vand.u32 2147483647, %v333
        %vm353 = vcmp.lt.f32.partialorder %v352, 0.0004427343
        %v354 = vsel %vm353, %v351, %v348
        %v355 = vadd.f32 %v335, 1.0
        %v356 = vlog2.pop %v355
        %v357 = vmul.f32 %v356, 0.6931472
        %v358 = vmul.f32 -0.5, %v335
        %v359 = vadd.f32 %v358, 1.0
        %v360 = vmul.f32 %v359, %v335
        %v361 = vand.u32 2147483647, %v335
        %vm362 = vcmp.lt.f32.partialorder %v361, 0.0004427343
        %v363 = vsel %vm362, %v360, %v357
        %v364 = vadd.f32 %v337, 1.0
        %v365 = vlog2.pop %v364
        %v366 = vmul.f32 %v365, 0.6931472
        %v367 = vmul.f32 -0.5, %v337
        %v368 = vadd.f32 %v367, 1.0
        %v369 = vmul.f32 %v368, %v337
        %v370 = vand.u32 2147483647, %v337
        %vm371 = vcmp.lt.f32.partialorder %v370, 0.0004427343
        %v372 = vsel %vm371, %v369, %v366
        %v373 = vadd.f32 %v339, 1.0
        %v374 = vlog2.pop %v373
        %v375 = vmul.f32 %v374, 0.6931472
        %v376 = vmul.f32 -0.5, %v339
        %v377 = vadd.f32 %v376, 1.0
        %v378 = vmul.f32 %v377, %v339
        %v379 = vand.u32 2147483647, %v339
        %vm380 = vcmp.lt.f32.partialorder %v379, 0.0004427343
        %v381 = vsel %vm380, %v378, %v375
        %v382 = vadd.f32 %v341, 1.0
        %v383 = vlog2.pop %v382
        %v384 = vmul.f32 %v383, 0.6931472
        %v385 = vmul.f32 -0.5, %v341
        %v386 = vadd.f32 %v385, 1.0
        %v387 = vmul.f32 %v386, %v341
        %v388 = vand.u32 2147483647, %v341
        %vm389 = vcmp.lt.f32.partialorder %v388, 0.0004427343
        %v390 = vsel %vm389, %v387, %v384
        %v391 = vadd.f32 %v343, 1.0
        %v392 = vlog2.pop %v391
        %v393 = vmul.f32 %v392, 0.6931472
        %v394 = vmul.f32 -0.5, %v343
        %v395 = vadd.f32 %v394, 1.0
        %v396 = vmul.f32 %v395, %v343
        %v397 = vand.u32 2147483647, %v343
        %vm398 = vcmp.lt.f32.partialorder %v397, 0.0004427343
        %v399 = vsel %vm398, %v396, %v393
        %v400 = vadd.f32 %v345, 1.0
        %v401 = vlog2.pop %v400
        %v402 = vmul.f32 %v401, 0.6931472
        %v403 = vmul.f32 -0.5, %v345
        %v404 = vadd.f32 %v403, 1.0
        %v405 = vmul.f32 %v404, %v345
        %v406 = vand.u32 2147483647, %v345
        %vm407 = vcmp.lt.f32.partialorder %v406, 0.0004427343
        %v408 = vsel %vm407, %v405, %v402
        %v409 = vadd.f32 %v311, %v354
        %v410 = vadd.f32 %v312, %v363
        %v411 = vadd.f32 %v313, %v372
        %v412 = vadd.f32 %v314, %v381
        %v413 = vadd.f32 %v315, %v390
        %v414 = vadd.f32 %v316, %v399
        %v415 = vadd.f32 %v317, %v408
        %v416 = vld [vmem:[#allocation2] sm:$0xff]
        %v417 = vld [vmem:[#allocation2 + $0x8] sm:$0xff]
        %v418 = vld [vmem:[#allocation2 + $0x10] sm:$0xff]
        %v419 = vld [vmem:[#allocation2 + $0x18] sm:$0xff]
        %v420 = vld [vmem:[#allocation2 + $0x20] sm:$0xff]
        %v421 = vld [vmem:[#allocation2 + $0x28] sm:$0xff]
        %v422 = vld [vmem:[#allocation2 + $0x30] sm:$0xff]
        %v423 = vadd.f32 %v416, %v409
        %v424 = vadd.f32 %v417, %v410
        %v425 = vadd.f32 %v418, %v411
        %v426 = vadd.f32 %v419, %v412
        %v427 = vadd.f32 %v420, %v413
        %v428 = vadd.f32 %v421, %v414
        %v429 = vadd.f32 %v422, %v415
        %430 = vst [vmem:[#allocation2] sm:$0xff] %v423
        %431 = vst [vmem:[#allocation2 + $0x8] sm:$0xff] %v424
        %432 = vst [vmem:[#allocation2 + $0x10] sm:$0xff] %v425
        %433 = vst [vmem:[#allocation2 + $0x18] sm:$0xff] %v426
        %434 = vst [vmem:[#allocation2 + $0x20] sm:$0xff] %v427
        %435 = vst [vmem:[#allocation2 + $0x28] sm:$0xff] %v428
        %436 = vst [vmem:[#allocation2 + $0x30] sm:$0xff] %v429
        %p437 = scmp.eq.s32.totalorder %s26, 1
        // Predicated region
        $region49: #{tpu_custom_call.1} parent=31 // pred_check
          %p438 = pneg %p437
        $region50: #{tpu_custom_call.1} parent=31 // pred_check_branch
          %440 = sbr.rel (%p438) target = $region52
        $region51: #{tpu_custom_call.1} parent=31 // pred_region
          %v441 = vld [vmem:[#allocation2] sm:$0xff]
          %v442 = vld [vmem:[#allocation2 + $0x8] sm:$0xff]
          %v443 = vld [vmem:[#allocation2 + $0x10] sm:$0xff]
          %v444 = vld [vmem:[#allocation2 + $0x18] sm:$0xff]
          %v445 = vld [vmem:[#allocation2 + $0x20] sm:$0xff]
          %v446 = vld [vmem:[#allocation2 + $0x28] sm:$0xff]
          %v447 = vld [vmem:[#allocation2 + $0x30] sm:$0xff]
          %v448 = vld [vmem:[#allocation8] sm:$0xff]
          %v449 = vld [vmem:[#allocation8 + $0x8] sm:$0xff]
          %v450 = vld [vmem:[#allocation8 + $0x10] sm:$0xff]
          %v451 = vld [vmem:[#allocation8 + $0x18] sm:$0xff]
          %v452 = vld [vmem:[#allocation8 + $0x20] sm:$0xff]
          %v453 = vld [vmem:[#allocation8 + $0x28] sm:$0xff]
          %v454 = vld [vmem:[#allocation8 + $0x30] sm:$0xff]
          %v455 = vmul.f32 %v441, %v448
          %v456 = vmul.f32 %v442, %v449
          %v457 = vmul.f32 %v443, %v450
          %v458 = vmul.f32 %v444, %v451
          %v459 = vmul.f32 %v445, %v452
          %v460 = vmul.f32 %v446, %v453
          %v461 = vmul.f32 %v447, %v454
          %v462 = vadd.f32 %v455, %v456
          %v463 = vadd.f32 %v462, %v457
          %v464 = vadd.f32 %v463, %v458
          %v465 = vadd.f32 %v464, %v459
          %v466 = vadd.f32 %v465, %v460
          %v467 = vadd.f32 %v466, %v461
          %468 = vadd.xlane.f32.xlu0 %v467
          %v469 = vpop.xlane.xlu0 %468
          %v470 = vrot.slane %v469, 4
          %v471 = vadd.f32 %v469, %v470
          %v472 = vrot.slane %v471, 2
          %v473 = vadd.f32 %v471, %v472
          %v474 = vrot.slane %v473, 1
          %v475 = vadd.f32 %v473, %v474
          %s476 = vtos %v475
          %s477 = scalar_lea.smem [#allocation9], 0
          %478 = sst [smem:[%s477]] %s476
        $region52: #{tpu_custom_call.1} parent=31 // pred_fallthru
          _
        // Predicated region
        $region53: #{tpu_custom_call.1} parent=31 // pred_check
          %p479 = pneg %p132
        $region54: #{tpu_custom_call.1} parent=31 // pred_check_branch
          %481 = sbr.rel (%p479) target = $region56
        $region55: #{tpu_custom_call.1} parent=31 // pred_region
          %483 = vsyncadd [#allocation5], 0
          %s484 = scalar_lea.hbm %s3, %s25
          %s486 = sshll.u32 %s484, 4
          %s487 = int_to_ptr.hbm [resolvable:$true] %s486
          %489 = dma.smem_to_hbm [#allocation9], 16, %s487, [#allocation5]
        $region56: #{tpu_custom_call.1} parent=31 // pred_fallthru
          _
        // Predicated region
        $region57: #{tpu_custom_call.1} parent=31 // pred_check
          %p490 = pneg %p132
        $region58: #{tpu_custom_call.1} parent=31 // pred_check_branch
          %492 = sbr.rel (%p490) target = $region60
        $region59: #{tpu_custom_call.1} parent=31 // pred_region
          %494 = dma.done [#allocation5], 16
        $region60: #{tpu_custom_call.1} parent=31 // pred_fallthru
          _
        %495 = sfence
      $region32: #{tpu_custom_call.1} parent=5 // pred_fallthru
        _
      %p496 = scmp.le.s32.totalorder 2, %s16
      // Predicated region
      $region61: #{tpu_custom_call.1} parent=5 // pred_check
        %p497 = pneg %p496
      $region62: #{tpu_custom_call.1} parent=5 // pred_check_branch
        %499 = sbr.rel (%p497) target = $region64
      $region63: #{tpu_custom_call.1} parent=5 // pred_region
        %s500 = ssub.s32 %s16, 2
      $region64: #{tpu_custom_call.1} parent=5 // pred_fallthru
        _
    $region6: #{tpu_custom_call.1} parent=1 // loop_footer
      %s20 = sadd.s32 1, %s16
    $region7: #{tpu_custom_call.1} parent=1 // loop_footer_branch
      %15 = sbr.rel target = $region3
    $region8: #{tpu_custom_call.1} parent=1 // loop_exit
      _
    %501 = vsyncpa [#allocation4], 1
    %s502 = scalar_lea.sflag [#allocation4], 1
    %503 = vsyncpa %s502, 1
    %504 = vsyncpa [#allocation7], 1
    %s505 = scalar_lea.sflag [#allocation7], 1
    %506 = vsyncpa %s505, 1
    %507 = vsyncpa [#allocation5], 1
    %s508 = scalar_lea.sflag [#allocation5], 1
    %509 = vsyncpa %s508, 1

</llo_original>
